<compile_context>
chip_gen: v6e
topology: v6e:2x2x1
jax: 0.10.0
libtpu: 0.0.40
codegen_flags: <defaults>
</compile_context>

<pallas_src>
import jax
import jax.numpy as jnp
from jax.experimental import pallas as pl
from jax.experimental.pallas import tpu as pltpu


def _round_up(x, m):
    return (x + m - 1) // m * m


def _critic_kernel(x_ref, w1_ref, w2_ref, packed_ref, b3_ref, o_ref):
    # x:      (TM, Dp)   f32   (cast to bf16 only for the MXU operands)
    # w1:     (Dp, 256)  bf16
    # w2:     (256, 128) bf16
    # packed: (1, 512)   f32   = [ b1(256) | b2(128) | w3_row(128) ]
    # b3:     (1, 1)     f32   in SMEM
    # o:      (TM, 1)    f32
    b1 = packed_ref[:, 0:256]      # (1, 256)
    b2 = packed_ref[:, 256:384]    # (1, 128)
    w3 = packed_ref[:, 384:512]    # (1, 128)

    x = x_ref[...].astype(jnp.bfloat16)
    h1 = jnp.dot(x, w1_ref[...], preferred_element_type=jnp.float32) + b1
    h1 = jnp.maximum(h1, 0.0).astype(jnp.bfloat16)                     # ReLU (VPU)
    h2 = jnp.dot(h1, w2_ref[...], preferred_element_type=jnp.float32) + b2
    h2 = jnp.maximum(h2, 0.0)                                          # ReLU (VPU)
    # Final 128 -> 1 layer as a lane reduction (VPU mul + XLU reduce), no MXU.
    v = jnp.sum(h2 * w3, axis=-1, keepdims=True) + b3_ref[0, 0]
    o_ref[...] = v


def critic_forward_batch(states, params):
    """states: (B, ...) with prod(...)==map_size*27.  Returns (B,) f32 values."""
    d_in = params["d_in"]
    w1, w2, packed, b3 = params["w1"], params["w2"], params["packed"], params["b3"]
    dp = w1.shape[0]

    B = states.shape[0]
    x = states.reshape(B, -1).astype(jnp.float32)
    assert x.shape[1] == d_in, f"expected {d_in} features, got {x.shape[1]}"

    # Row tile: multiple of 8 (f32 sublanes); 128 rows per MXU push once batched.
    tm = 128 if B >= 128 else _round_up(B, 8)
    bp = _round_up(B, tm)
    x = jnp.pad(x, ((0, bp - B), (0, dp - d_in)))   # zero-pad batch rows + K dim

    # NOTE: at map_size=16 all weights (~0.3 MB in bf16) fit VMEM on every
    # generation.  If map_size grows large, tile W1 over K with an extra grid
    # axis + f32 accumulator scratch and set vmem_limit_bytes (v7x has 64 MiB).
    out = pl.pallas_call(
        _critic_kernel,
        out_shape=jax.ShapeDtypeStruct((bp, 1), jnp.float32),
        grid=(bp // tm,),
        in_specs=[
            pl.BlockSpec((tm, dp), lambda i: (i, 0)),          # x tile
            pl.BlockSpec((dp, 256), lambda i: (0, 0)),          # W1 (resident)
            pl.BlockSpec((256, 128), lambda i: (0, 0)),         # W2 (resident)
            pl.BlockSpec((1, 512), lambda i: (0, 0)),           # b1|b2|w3 packed
            pl.BlockSpec(memory_space=pltpu.MemorySpace.SMEM),  # b3 scalar
        ],
        out_specs=pl.BlockSpec((tm, 1), lambda i: (i, 0)),
        compiler_params=pltpu.CompilerParams(
            dimension_semantics=("parallel",),  # v7x: shard rows across both TCs
        ),
    )(x, w1, w2, packed, b3)
    return out[:B, 0]


def critic_forward(state, params):
    """Single-state path matching the original module: state -> (1,) value."""
    value = critic_forward_batch(state.reshape(1, -1), params)
    # NOTE: the original module does `print('Todo bien en critico!', value)` here;
    # omitted to keep script output clean.
    return value  # shape (1,), like torch's 128->1 Linear on a 1-D input


def init_params(key, map_size):
    """Deterministic init mimicking torch.nn.Linear's U(-1/sqrt(fan_in), 1/sqrt(fan_in)).

    Weights are stored (in_features, out_features); W1/W2 in bf16, biases f32.
    W1's input dim is zero-padded to a multiple of 128; b1/b2/w3 are packed into
    one (1, 512) f32 buffer; b3 is a lone (1, 1) f32 scalar (lives in SMEM).
    """
    d_in = map_size * 27
    dp = _round_up(d_in, 128)

    def lin(kw, kb, fi, fo):
        bound = 1.0 / (fi ** 0.5)
        w = jax.random.uniform(kw, (fi, fo), jnp.float32, -bound, bound)
        b = jax.random.uniform(kb, (fo,), jnp.float32, -bound, bound)
        return w, b

    k1w, k1b, k2w, k2b, k3w, k3b = jax.random.split(key, 6)
    w1, b1 = lin(k1w, k1b, d_in, 256)
    w2, b2 = lin(k2w, k2b, 256, 128)
    w3, b3 = lin(k3w, k3b, 128, 1)

    w1_padded = jnp.zeros((dp, 256), jnp.float32).at[:d_in].set(w1)
    packed = jnp.concatenate([b1, b2, w3[:, 0]]).reshape(1, 512).astype(jnp.float32)

    return {
        "w1": w1_padded.astype(jnp.bfloat16),
        "w2": w2.astype(jnp.bfloat16),
        "packed": packed,
        "b3": b3.reshape(1, 1).astype(jnp.float32),
        "d_in": d_in,
    }


def _reference(states, params):
    """Pure-JAX reference using the same (bf16) weights, f32 math."""
    d_in = params["d_in"]
    w1 = params["w1"].astype(jnp.float32)[:d_in]
    w2 = params["w2"].astype(jnp.float32)
    b1 = params["packed"][0, 0:256]
    b2 = params["packed"][0, 256:384]
    w3 = params["packed"][0, 384:512]
    b3 = params["b3"][0, 0]
    x = states.reshape(states.shape[0], -1).astype(jnp.float32)
    h1 = jnp.maximum(x @ w1 + b1, 0.0)
    h2 = jnp.maximum(h1 @ w2 + b2, 0.0)
    return h2 @ w3 + b3


if __name__ == "__main__":
    key = jax.random.PRNGKey(0)
    map_size = 16                                   # small synthetic map
    k_state, k_params = jax.random.split(key)

    params = init_params(k_params, map_size)

    # Batched states: (B, 27, map_size); each sample flattens to 27*16 = 432 feats.
    B = 64
    states = jax.random.normal(k_state, (B, 27, map_size), jnp.float32)

    values = critic_forward_batch(states, params)
    jax.block_until_ready(values)
    assert values.shape == (B,) and values.dtype == jnp.float32

    # Single-state path (original module semantics).
    v1 = critic_forward(states[0], params)
    jax.block_until_ready(v1)
    assert v1.shape == (1,) and v1.dtype == jnp.float32

    # Consistency + numerics checks (bf16 weights -> loose tolerance).
    ref = _reference(states, params)
    assert jnp.allclose(values, ref, atol=5e-2, rtol=5e-2)
    assert jnp.allclose(v1[0], values[0], atol=5e-3, rtol=5e-3)

    print("KERNEL_OK")
</pallas_src>

<mosaic_0001>
module attributes {stable_mosaic.version = 11 : i64} {
  func.func @_critic_kernel(%arg0: i32, %arg1: memref<64x512xf32, #tpu.memory_space<vmem>>, %arg2: memref<512x256xbf16, #tpu.memory_space<vmem>>, %arg3: memref<256x128xbf16, #tpu.memory_space<vmem>>, %arg4: memref<1x512xf32, #tpu.memory_space<vmem>>, %arg5: memref<1x1xf32, #tpu.memory_space<smem>>, %arg6: memref<64x1xf32, #tpu.memory_space<vmem>>) attributes {dimension_semantics = [#tpu.dimension_semantics<parallel>], iteration_bounds = array<i64: 1>, scalar_prefetch = 0 : i64, scratch_operands = 0 : i64, tpu.core_type = #tpu.core_type<tc>, window_params = [{transform_indices = @transform_0, window_bounds = array<i64: 64, 512>}, {pipeline_mode = #tpu.pipeline_mode<synchronous>, transform_indices = @transform_1, window_bounds = array<i64: 512, 256>}, {pipeline_mode = #tpu.pipeline_mode<synchronous>, transform_indices = @transform_2, window_bounds = array<i64: 256, 128>}, {pipeline_mode = #tpu.pipeline_mode<synchronous>, transform_indices = @transform_3, window_bounds = array<i64: 1, 512>}, {transform_indices = @transform_4, window_bounds = array<i64: 1, 1>}, {transform_indices = @transform_5, window_bounds = array<i64: 64, 1>}]} {
    %c0 = arith.constant 0 : index
    %c0_0 = arith.constant 0 : index
    %0 = vector.load %arg4[%c0, %c0_0] : memref<1x512xf32, #tpu.memory_space<vmem>>, vector<1x256xf32>
    %c0_1 = arith.constant 0 : index
    %c256 = arith.constant 256 : index
    %1 = vector.load %arg4[%c0_1, %c256] : memref<1x512xf32, #tpu.memory_space<vmem>>, vector<1x128xf32>
    %c0_2 = arith.constant 0 : index
    %c384 = arith.constant 384 : index
    %2 = vector.load %arg4[%c0_2, %c384] : memref<1x512xf32, #tpu.memory_space<vmem>>, vector<1x128xf32>
    %c0_3 = arith.constant 0 : index
    %c0_4 = arith.constant 0 : index
    %3 = vector.load %arg1[%c0_3, %c0_4] : memref<64x512xf32, #tpu.memory_space<vmem>>, vector<64x512xf32>
    %4 = arith.truncf %3 : vector<64x512xf32> to vector<64x512xbf16>
    %c0_5 = arith.constant 0 : index
    %c0_6 = arith.constant 0 : index
    %5 = vector.load %arg2[%c0_5, %c0_6] : memref<512x256xbf16, #tpu.memory_space<vmem>>, vector<512x256xbf16>
    %cst = arith.constant dense<0.000000e+00> : vector<64x256xf32>
    %6 = tpu.matmul %4, %5, %cst {dimension_numbers = #tpu.dot_dimension_numbers<[1], [0], [0], [1], [0, 0, 1, 1], [], []>} : vector<64x512xbf16>, vector<512x256xbf16>, vector<64x256xf32> -> vector<64x256xf32>
    %7 = vector.broadcast %0 : vector<1x256xf32> to vector<64x256xf32>
    %8 = arith.addf %6, %7 : vector<64x256xf32>
    %cst_7 = arith.constant 0.000000e+00 : f32
    %9 = vector.broadcast %cst_7 : f32 to vector<64x256xf32>
    %10 = arith.maximumf %8, %9 : vector<64x256xf32>
    %11 = arith.truncf %10 : vector<64x256xf32> to vector<64x256xbf16>
    %c0_8 = arith.constant 0 : index
    %c0_9 = arith.constant 0 : index
    %12 = vector.load %arg3[%c0_8, %c0_9] : memref<256x128xbf16, #tpu.memory_space<vmem>>, vector<256x128xbf16>
    %cst_10 = arith.constant dense<0.000000e+00> : vector<64x128xf32>
    %13 = tpu.matmul %11, %12, %cst_10 {dimension_numbers = #tpu.dot_dimension_numbers<[1], [0], [0], [1], [0, 0, 1, 1], [], []>} : vector<64x256xbf16>, vector<256x128xbf16>, vector<64x128xf32> -> vector<64x128xf32>
    %14 = vector.broadcast %1 : vector<1x128xf32> to vector<64x128xf32>
    %15 = arith.addf %13, %14 : vector<64x128xf32>
    %cst_11 = arith.constant 0.000000e+00 : f32
    %16 = vector.broadcast %cst_11 : f32 to vector<64x128xf32>
    %17 = arith.maximumf %15, %16 : vector<64x128xf32>
    %18 = vector.broadcast %2 : vector<1x128xf32> to vector<64x128xf32>
    %19 = arith.mulf %17, %18 : vector<64x128xf32>
    %cst_12 = arith.constant dense<0.000000e+00> : vector<64xf32>
    %20 = vector.multi_reduction <add>, %19, %cst_12 [1] : vector<64x128xf32> to vector<64xf32>
    %21 = vector.shape_cast %20 : vector<64xf32> to vector<64x1xf32>
    %c0_13 = arith.constant 0 : index
    %c0_14 = arith.constant 0 : index
    %22 = memref.load %arg5[%c0_13, %c0_14] : memref<1x1xf32, #tpu.memory_space<smem>>
    %23 = vector.broadcast %22 : f32 to vector<64x1xf32>
    %24 = arith.addf %21, %23 : vector<64x1xf32>
    %c0_15 = arith.constant 0 : index
    %c0_16 = arith.constant 0 : index
    %25 = vector.load %arg6[%c0_15, %c0_16] : memref<64x1xf32, #tpu.memory_space<vmem>>, vector<64x1xf32>
    tpu.vector_store %arg6[%c0_15, %c0_16], %24 {strides = array<i32>} : memref<64x1xf32, #tpu.memory_space<vmem>>, vector<64x1xf32>,
    return
  }
  func.func @transform_0(%arg0: i32) -> (i32, i32) {
    %c0_i32 = arith.constant 0 : i32
    %c0_i32_0 = arith.constant 0 : i32
    return %arg0, %c0_i32 : i32, i32
  }
  func.func @transform_1(%arg0: i32) -> (i32, i32) {
    %c0_i32 = arith.constant 0 : i32
    %c0_i32_0 = arith.constant 0 : i32
    %c0_i32_1 = arith.constant 0 : i32
    return %c0_i32, %c0_i32_0 : i32, i32
  }
  func.func @transform_2(%arg0: i32) -> (i32, i32) {
    %c0_i32 = arith.constant 0 : i32
    %c0_i32_0 = arith.constant 0 : i32
    %c0_i32_1 = arith.constant 0 : i32
    return %c0_i32, %c0_i32_0 : i32, i32
  }
  func.func @transform_3(%arg0: i32) -> (i32, i32) {
    %c0_i32 = arith.constant 0 : i32
    %c0_i32_0 = arith.constant 0 : i32
    %c0_i32_1 = arith.constant 0 : i32
    return %c0_i32, %c0_i32_0 : i32, i32
  }
  func.func @transform_4(%arg0: i32) -> (i32, i32) {
    %c0_i32 = arith.constant 0 : i32
    %c0_i32_0 = arith.constant 0 : i32
    %c0_i32_1 = arith.constant 0 : i32
    return %c0_i32, %c0_i32_0 : i32, i32
  }
  func.func @transform_5(%arg0: i32) -> (i32, i32) {
    %c0_i32 = arith.constant 0 : i32
    %c0_i32_0 = arith.constant 0 : i32
    return %arg0, %c0_i32 : i32, i32
  }
}

</mosaic_0001>

<llo_original>
// kernel: tpu_custom_call.1
$region0: #{tpu_custom_call.1}
  #allocation0 [shape = 'u32[]', space=smem, size = 0x4, offset = 0x4, fixed_abs, tag = 'smem constant byte address 0x4 - core index']
  #allocation1 [shape = 'u32[144,128]{1,0:T(1,128)}', space=vmem, size = 0x12000, scoped, tag = 'internal scratch']
  #allocation2 [shape = 'f32[1,1]{1,0:T(1,128)S(6)}', space=smem, size = 0x200, scoped, tag = 'scoped memory for tpu_custom_call.1']
  %s0 = inlined_call_operand.hbm [shape: f32[64,512], index: 0, kind: input, shape index: {}]
  %s1 = inlined_call_operand.hbm [shape: bf16[512,256], index: 1, kind: input, shape index: {}]
  %s2 = inlined_call_operand.hbm [shape: bf16[256,128], index: 2, kind: input, shape index: {}]
  %s3 = inlined_call_operand.vmem [shape: f32[1,512], index: 3, kind: input, shape index: {}]
  %s4 = inlined_call_operand.<no memory space> [shape: f32[1,1], index: 4, kind: input, shape index: {}]
  %s5 = inlined_call_operand.vmem [shape: f32[64,1], index: 5, kind: output, shape index: {}]
  %s6 = sld [smem:[#allocation0]]
  $region42: #{tpu_custom_call.1} parent=0
    _
  %s8 = ssub.s32 1, %s6
  %s9 = scalar_select 0, %s8, %s6
  %10 = sst [smem:[#allocation2]] %s4
  $region1: #{tpu_custom_call.1} parent=0
    #allocation3 [shape = 'u8[131072]{0}', space=vmem, size = 0x20000, scoped, tag = 'input window, operand 0, single buffered']
    #allocation4 [shape = 's32[1]{0}', space=sflag, size = 0x4, scoped, tag = 'scoped memory for tpu_custom_call.1']
    #allocation5 [shape = 'u8[262144]{0}', space=vmem, size = 0x40000, scoped, tag = 'input window, operand 1, single buffered']
    #allocation6 [shape = 's32[1]{0}', space=sflag, size = 0x4, scoped, tag = 'scoped memory for tpu_custom_call.1']
    #allocation7 [shape = 'u8[65536]{0}', space=vmem, size = 0x10000, scoped, tag = 'input window, operand 2, single buffered']
    %11 = vsyncpa [#allocation4], 0
    %12 = vsyncpa [#allocation6], 0
    // Predicated region
    $region2: #{tpu_custom_call.1} parent=1 // pred_check
      _
    $region3: #{tpu_custom_call.1} parent=1 // pred_check_branch
      %14 = sbr.rel (0) target = $region5
    $region4: #{tpu_custom_call.1} parent=1 // pred_region
      %s16 = ssub.s32 4096, 4096
      %17 = vsyncadd [#allocation4], %s16
      %s18 = sshll.u32 [#allocation3], 4
      %s19 = int_to_ptr.vmem [resolvable:$true] %s18
      %24 = dma.hbm_to_vmem [thread:$0]  %s0, 4096, %s19, [#allocation4], 512, 512, 32
    $region5: #{tpu_custom_call.1} parent=1 // pred_fallthru
      _
    // Predicated region
    $region6: #{tpu_custom_call.1} parent=1 // pred_check
      _
    $region7: #{tpu_custom_call.1} parent=1 // pred_check_branch
      %26 = sbr.rel (0) target = $region9
    $region8: #{tpu_custom_call.1} parent=1 // pred_region
      %s28 = ssub.s32 8192, 8192
      %29 = vsyncadd [#allocation6], %s28
      %s30 = sshll.u32 [#allocation5], 4
      %s31 = int_to_ptr.vmem [resolvable:$true] %s30
      %36 = dma.hbm_to_vmem [thread:$0]  %s1, 8192, %s31, [#allocation6], 128, 128, 8
    $region9: #{tpu_custom_call.1} parent=1 // pred_fallthru
      _
    // Predicated region
    $region10: #{tpu_custom_call.1} parent=1 // pred_check
      _
    $region11: #{tpu_custom_call.1} parent=1 // pred_check_branch
      %38 = sbr.rel (0) target = $region13
    $region12: #{tpu_custom_call.1} parent=1 // pred_region
      %s40 = ssub.s32 2048, 2048
      %41 = vsyncadd [#allocation6], %s40
      %s42 = sshll.u32 [#allocation7], 4
      %s43 = int_to_ptr.vmem [resolvable:$true] %s42
      %48 = dma.hbm_to_vmem [thread:$0]  %s2, 2048, %s43, [#allocation6], 64, 64, 4
    $region13: #{tpu_custom_call.1} parent=1 // pred_fallthru
      _
    // Predicated region
    $region14: #{tpu_custom_call.1} parent=1 // pred_check
      _
    $region15: #{tpu_custom_call.1} parent=1 // pred_check_branch
      %50 = sbr.rel (0) target = $region17
    $region16: #{tpu_custom_call.1} parent=1 // pred_region
      _
    $region17: #{tpu_custom_call.1} parent=1 // pred_fallthru
      _
    // Predicated region
    $region18: #{tpu_custom_call.1} parent=1 // pred_check
      _
    $region19: #{tpu_custom_call.1} parent=1 // pred_check_branch
      %52 = sbr.rel (0) target = $region21
    $region20: #{tpu_custom_call.1} parent=1 // pred_region
      _
    $region21: #{tpu_custom_call.1} parent=1 // pred_fallthru
      _
    // Predicated region
    $region22: #{tpu_custom_call.1} parent=1 // pred_check
      _
    $region23: #{tpu_custom_call.1} parent=1 // pred_check_branch
      %54 = sbr.rel (0) target = $region25
    $region24: #{tpu_custom_call.1} parent=1 // pred_region
      %55 = dma.done [#allocation4], 4096
    $region25: #{tpu_custom_call.1} parent=1 // pred_fallthru
      _
    // Predicated region
    $region26: #{tpu_custom_call.1} parent=1 // pred_check
      _
    $region27: #{tpu_custom_call.1} parent=1 // pred_check_branch
      %57 = sbr.rel (0) target = $region29
    $region28: #{tpu_custom_call.1} parent=1 // pred_region
      %58 = dma.done [#allocation6], 8192
    $region29: #{tpu_custom_call.1} parent=1 // pred_fallthru
      _
    // Predicated region
    $region30: #{tpu_custom_call.1} parent=1 // pred_check
      _
    $region31: #{tpu_custom_call.1} parent=1 // pred_check_branch
      %60 = sbr.rel (0) target = $region33
    $region32: #{tpu_custom_call.1} parent=1 // pred_region
      %61 = dma.done [#allocation6], 2048
    $region33: #{tpu_custom_call.1} parent=1 // pred_fallthru
      _
    %v63 = vld [vmem:[%s3] sm:$0x3]
    %v64 = vld [vmem:[%s3 + $0x2] sm:$0x1]
    %v65 = vld [vmem:[%s3 + $0x3] sm:$0x1]
    %v66 = vld [vmem:[#allocation3] sm:$0xff]
    %v67 = vld [vmem:[#allocation3 + $0x8] sm:$0xff]
    %v68 = vld [vmem:[#allocation3 + $0x10] sm:$0xff]
    %v69 = vld [vmem:[#allocation3 + $0x18] sm:$0xff]
    %v70 = vld [vmem:[#allocation3 + $0x20] sm:$0xff]
    %v71 = vld [vmem:[#allocation3 + $0x28] sm:$0xff]
    %v72 = vld [vmem:[#allocation3 + $0x30] sm:$0xff]
    %v73 = vld [vmem:[#allocation3 + $0x38] sm:$0xff]
    %v74 = vld [vmem:[#allocation3 + $0x40] sm:$0xff]
    %v75 = vld [vmem:[#allocation3 + $0x48] sm:$0xff]
    %v76 = vld [vmem:[#allocation3 + $0x50] sm:$0xff]
    %v77 = vld [vmem:[#allocation3 + $0x58] sm:$0xff]
    %v78 = vld [vmem:[#allocation3 + $0x60] sm:$0xff]
    %v79 = vld [vmem:[#allocation3 + $0x68] sm:$0xff]
    %v80 = vld [vmem:[#allocation3 + $0x70] sm:$0xff]
    %v81 = vld [vmem:[#allocation3 + $0x78] sm:$0xff]
    %v82 = vld [vmem:[#allocation3 + $0x80] sm:$0xff]
    %v83 = vld [vmem:[#allocation3 + $0x88] sm:$0xff]
    %v84 = vld [vmem:[#allocation3 + $0x90] sm:$0xff]
    %v85 = vld [vmem:[#allocation3 + $0x98] sm:$0xff]
    %v86 = vld [vmem:[#allocation3 + $0xa0] sm:$0xff]
    %v87 = vld [vmem:[#allocation3 + $0xa8] sm:$0xff]
    %v88 = vld [vmem:[#allocation3 + $0xb0] sm:$0xff]
    %v89 = vld [vmem:[#allocation3 + $0xb8] sm:$0xff]
    %v90 = vld [vmem:[#allocation3 + $0xc0] sm:$0xff]
    %v91 = vld [vmem:[#allocation3 + $0xc8] sm:$0xff]
    %v92 = vld [vmem:[#allocation3 + $0xd0] sm:$0xff]
    %v93 = vld [vmem:[#allocation3 + $0xd8] sm:$0xff]
    %v94 = vld [vmem:[#allocation3 + $0xe0] sm:$0xff]
    %v95 = vld [vmem:[#allocation3 + $0xe8] sm:$0xff]
    %v96 = vld [vmem:[#allocation3 + $0xf0] sm:$0xff]
    %v97 = vld [vmem:[#allocation3 + $0xf8] sm:$0xff]
    %v98 = vpack.c.bf16 %v70, %v66
    %v99 = vpack.c.bf16 %v71, %v67
    %v100 = vpack.c.bf16 %v72, %v68
    %v101 = vpack.c.bf16 %v73, %v69
    %v102 = vpack.c.bf16 %v78, %v74
    %v103 = vpack.c.bf16 %v79, %v75
    %v104 = vpack.c.bf16 %v80, %v76
    %v105 = vpack.c.bf16 %v81, %v77
    %v106 = vpack.c.bf16 %v86, %v82
    %v107 = vpack.c.bf16 %v87, %v83
    %v108 = vpack.c.bf16 %v88, %v84
    %v109 = vpack.c.bf16 %v89, %v85
    %v110 = vpack.c.bf16 %v94, %v90
    %v111 = vpack.c.bf16 %v95, %v91
    %v112 = vpack.c.bf16 %v96, %v92
    %v113 = vpack.c.bf16 %v97, %v93
    %v114 = vld [vmem:[#allocation5] sm:$0xff]
    %v115 = vld [vmem:[#allocation5 + $0x8] sm:$0xff]
    %v116 = vld [vmem:[#allocation5 + $0x10] sm:$0xff]
    %v117 = vld [vmem:[#allocation5 + $0x18] sm:$0xff]
    %v118 = vld [vmem:[#allocation5 + $0x20] sm:$0xff]
    %v119 = vld [vmem:[#allocation5 + $0x28] sm:$0xff]
    %v120 = vld [vmem:[#allocation5 + $0x30] sm:$0xff]
    %v121 = vld [vmem:[#allocation5 + $0x38] sm:$0xff]
    %v122 = vld [vmem:[#allocation5 + $0x40] sm:$0xff]
    %v123 = vld [vmem:[#allocation5 + $0x48] sm:$0xff]
    %v124 = vld [vmem:[#allocation5 + $0x50] sm:$0xff]
    %v125 = vld [vmem:[#allocation5 + $0x58] sm:$0xff]
    %v126 = vld [vmem:[#allocation5 + $0x60] sm:$0xff]
    %v127 = vld [vmem:[#allocation5 + $0x68] sm:$0xff]
    %v128 = vld [vmem:[#allocation5 + $0x70] sm:$0xff]
    %v129 = vld [vmem:[#allocation5 + $0x78] sm:$0xff]
    %v130 = vld [vmem:[#allocation5 + $0x80] sm:$0xff]
    %v131 = vld [vmem:[#allocation5 + $0x88] sm:$0xff]
    %v132 = vld [vmem:[#allocation5 + $0x90] sm:$0xff]
    %v133 = vld [vmem:[#allocation5 + $0x98] sm:$0xff]
    %v134 = vld [vmem:[#allocation5 + $0xa0] sm:$0xff]
    %v135 = vld [vmem:[#allocation5 + $0xa8] sm:$0xff]
    %v136 = vld [vmem:[#allocation5 + $0xb0] sm:$0xff]
    %v137 = vld [vmem:[#allocation5 + $0xb8] sm:$0xff]
    %v138 = vld [vmem:[#allocation5 + $0xc0] sm:$0xff]
    %v139 = vld [vmem:[#allocation5 + $0xc8] sm:$0xff]
    %v140 = vld [vmem:[#allocation5 + $0xd0] sm:$0xff]
    %v141 = vld [vmem:[#allocation5 + $0xd8] sm:$0xff]
    %v142 = vld [vmem:[#allocation5 + $0xe0] sm:$0xff]
    %v143 = vld [vmem:[#allocation5 + $0xe8] sm:$0xff]
    %v144 = vld [vmem:[#allocation5 + $0xf0] sm:$0xff]
    %v145 = vld [vmem:[#allocation5 + $0xf8] sm:$0xff]
    %v146 = vld [vmem:[#allocation5 + $0x100] sm:$0xff]
    %v147 = vld [vmem:[#allocation5 + $0x108] sm:$0xff]
    %v148 = vld [vmem:[#allocation5 + $0x110] sm:$0xff]
    %v149 = vld [vmem:[#allocation5 + $0x118] sm:$0xff]
    %v150 = vld [vmem:[#allocation5 + $0x120] sm:$0xff]
    %v151 = vld [vmem:[#allocation5 + $0x128] sm:$0xff]
    %v152 = vld [vmem:[#allocation5 + $0x130] sm:$0xff]
    %v153 = vld [vmem:[#allocation5 + $0x138] sm:$0xff]
    %v154 = vld [vmem:[#allocation5 + $0x140] sm:$0xff]
    %v155 = vld [vmem:[#allocation5 + $0x148] sm:$0xff]
    %v156 = vld [vmem:[#allocation5 + $0x150] sm:$0xff]
    %v157 = vld [vmem:[#allocation5 + $0x158] sm:$0xff]
    %v158 = vld [vmem:[#allocation5 + $0x160] sm:$0xff]
    %v159 = vld [vmem:[#allocation5 + $0x168] sm:$0xff]
    %v160 = vld [vmem:[#allocation5 + $0x170] sm:$0xff]
    %v161 = vld [vmem:[#allocation5 + $0x178] sm:$0xff]
    %v162 = vld [vmem:[#allocation5 + $0x180] sm:$0xff]
    %v163 = vld [vmem:[#allocation5 + $0x188] sm:$0xff]
    %v164 = vld [vmem:[#allocation5 + $0x190] sm:$0xff]
    %v165 = vld [vmem:[#allocation5 + $0x198] sm:$0xff]
    %v166 = vld [vmem:[#allocation5 + $0x1a0] sm:$0xff]
    %v167 = vld [vmem:[#allocation5 + $0x1a8] sm:$0xff]
    %v168 = vld [vmem:[#allocation5 + $0x1b0] sm:$0xff]
    %v169 = vld [vmem:[#allocation5 + $0x1b8] sm:$0xff]
    %v170 = vld [vmem:[#allocation5 + $0x1c0] sm:$0xff]
    %v171 = vld [vmem:[#allocation5 + $0x1c8] sm:$0xff]
    %v172 = vld [vmem:[#allocation5 + $0x1d0] sm:$0xff]
    %v173 = vld [vmem:[#allocation5 + $0x1d8] sm:$0xff]
    %v174 = vld [vmem:[#allocation5 + $0x1e0] sm:$0xff]
    %v175 = vld [vmem:[#allocation5 + $0x1e8] sm:$0xff]
    %v176 = vld [vmem:[#allocation5 + $0x1f0] sm:$0xff]
    %v177 = vld [vmem:[#allocation5 + $0x1f8] sm:$0xff]
    %v179 = vlaneseq
    %v180 = vshrl.u32 %v179, 7
    %v181 = vsub.s32 0, %v180
    %v182 = vrot.slane %v63, %v181
    %v183 = vlaneseq
    %v184 = vshrl.u32 %v183, 7
    %v185 = vsub.s32 1, %v184
    %v186 = vrot.slane %v63, %v185
    %v253 = vunpack.c.l.b16 %v114
    %v254 = vunpack.c.h.b16 %v114
    %v255 = vunpack.c.l.b16 %v115
    %v256 = vunpack.c.h.b16 %v115
    %v257 = vunpack.c.l.b16 %v116
    %v258 = vunpack.c.h.b16 %v116
    %v259 = vunpack.c.l.b16 %v117
    %v260 = vunpack.c.h.b16 %v117
    %v261 = vunpack.c.l.b16 %v118
    %v262 = vunpack.c.h.b16 %v118
    %v263 = vunpack.c.l.b16 %v119
    %v264 = vunpack.c.h.b16 %v119
    %v265 = vunpack.c.l.b16 %v120
    %v266 = vunpack.c.h.b16 %v120
    %v267 = vunpack.c.l.b16 %v121
    %v268 = vunpack.c.h.b16 %v121
    %v269 = vunpack.c.l.b16 %v122
    %v270 = vunpack.c.h.b16 %v122
    %v271 = vunpack.c.l.b16 %v123
    %v272 = vunpack.c.h.b16 %v123
    %v273 = vunpack.c.l.b16 %v124
    %v274 = vunpack.c.h.b16 %v124
    %v275 = vunpack.c.l.b16 %v125
    %v276 = vunpack.c.h.b16 %v125
    %v277 = vunpack.c.l.b16 %v126
    %v278 = vunpack.c.h.b16 %v126
    %v279 = vunpack.c.l.b16 %v127
    %v280 = vunpack.c.h.b16 %v127
    %v281 = vunpack.c.l.b16 %v128
    %v282 = vunpack.c.h.b16 %v128
    %v283 = vunpack.c.l.b16 %v129
    %v284 = vunpack.c.h.b16 %v129
    %v285 = vunpack.c.l.b16 %v130
    %v286 = vunpack.c.h.b16 %v130
    %v287 = vunpack.c.l.b16 %v131
    %v288 = vunpack.c.h.b16 %v131
    %v289 = vunpack.c.l.b16 %v132
    %v290 = vunpack.c.h.b16 %v132
    %v291 = vunpack.c.l.b16 %v133
    %v292 = vunpack.c.h.b16 %v133
    %v293 = vunpack.c.l.b16 %v134
    %v294 = vunpack.c.h.b16 %v134
    %v295 = vunpack.c.l.b16 %v135
    %v296 = vunpack.c.h.b16 %v135
    %v297 = vunpack.c.l.b16 %v136
    %v298 = vunpack.c.h.b16 %v136
    %v299 = vunpack.c.l.b16 %v137
    %v300 = vunpack.c.h.b16 %v137
    %v301 = vunpack.c.l.b16 %v138
    %v302 = vunpack.c.h.b16 %v138
    %v303 = vunpack.c.l.b16 %v139
    %v304 = vunpack.c.h.b16 %v139
    %v305 = vunpack.c.l.b16 %v140
    %v306 = vunpack.c.h.b16 %v140
    %v307 = vunpack.c.l.b16 %v141
    %v308 = vunpack.c.h.b16 %v141
    %v309 = vunpack.c.l.b16 %v142
    %v310 = vunpack.c.h.b16 %v142
    %v311 = vunpack.c.l.b16 %v143
    %v312 = vunpack.c.h.b16 %v143
    %v313 = vunpack.c.l.b16 %v144
    %v314 = vunpack.c.h.b16 %v144
    %v315 = vunpack.c.l.b16 %v145
    %v316 = vunpack.c.h.b16 %v145
    %v317 = vunpack.c.l.b16 %v146
    %v318 = vunpack.c.h.b16 %v146
    %v319 = vunpack.c.l.b16 %v147
    %v320 = vunpack.c.h.b16 %v147
    %v321 = vunpack.c.l.b16 %v148
    %v322 = vunpack.c.h.b16 %v148
    %v323 = vunpack.c.l.b16 %v149
    %v324 = vunpack.c.h.b16 %v149
    %v325 = vunpack.c.l.b16 %v150
    %v326 = vunpack.c.h.b16 %v150
    %v327 = vunpack.c.l.b16 %v151
    %v328 = vunpack.c.h.b16 %v151
    %v329 = vunpack.c.l.b16 %v152
    %v330 = vunpack.c.h.b16 %v152
    %v331 = vunpack.c.l.b16 %v153
    %v332 = vunpack.c.h.b16 %v153
    %v333 = vunpack.c.l.b16 %v154
    %v334 = vunpack.c.h.b16 %v154
    %v335 = vunpack.c.l.b16 %v155
    %v336 = vunpack.c.h.b16 %v155
    %v337 = vunpack.c.l.b16 %v156
    %v338 = vunpack.c.h.b16 %v156
    %v339 = vunpack.c.l.b16 %v157
    %v340 = vunpack.c.h.b16 %v157
    %v341 = vunpack.c.l.b16 %v158
    %v342 = vunpack.c.h.b16 %v158
    %v343 = vunpack.c.l.b16 %v159
    %v344 = vunpack.c.h.b16 %v159
    %v345 = vunpack.c.l.b16 %v160
    %v346 = vunpack.c.h.b16 %v160
    %v347 = vunpack.c.l.b16 %v161
    %v348 = vunpack.c.h.b16 %v161
    %v349 = vunpack.c.l.b16 %v162
    %v350 = vunpack.c.h.b16 %v162
    %v351 = vunpack.c.l.b16 %v163
    %v352 = vunpack.c.h.b16 %v163
    %v353 = vunpack.c.l.b16 %v164
    %v354 = vunpack.c.h.b16 %v164
    %v355 = vunpack.c.l.b16 %v165
    %v356 = vunpack.c.h.b16 %v165
    %v357 = vunpack.c.l.b16 %v166
    %v358 = vunpack.c.h.b16 %v166
    %v359 = vunpack.c.l.b16 %v167
    %v360 = vunpack.c.h.b16 %v167
    %v361 = vunpack.c.l.b16 %v168
    %v362 = vunpack.c.h.b16 %v168
    %v363 = vunpack.c.l.b16 %v169
    %v364 = vunpack.c.h.b16 %v169
    %v365 = vunpack.c.l.b16 %v170
    %v366 = vunpack.c.h.b16 %v170
    %v367 = vunpack.c.l.b16 %v171
    %v368 = vunpack.c.h.b16 %v171
    %v369 = vunpack.c.l.b16 %v172
    %v370 = vunpack.c.h.b16 %v172
    %v371 = vunpack.c.l.b16 %v173
    %v372 = vunpack.c.h.b16 %v173
    %v373 = vunpack.c.l.b16 %v174
    %v374 = vunpack.c.h.b16 %v174
    %v375 = vunpack.c.l.b16 %v175
    %v376 = vunpack.c.h.b16 %v175
    %v377 = vunpack.c.l.b16 %v176
    %v378 = vunpack.c.h.b16 %v176
    %v379 = vunpack.c.l.b16 %v177
    %v380 = vunpack.c.h.b16 %v177
    %v381 = vpack.c.b16 %v255, %v253
    %v382 = vpack.c.b16 %v256, %v254
    %v383 = vpack.c.b16 %v259, %v257
    %v384 = vpack.c.b16 %v260, %v258
    %v385 = vpack.c.b16 %v263, %v261
    %v386 = vpack.c.b16 %v264, %v262
    %v387 = vpack.c.b16 %v267, %v265
    %v388 = vpack.c.b16 %v268, %v266
    %v389 = vpack.c.b16 %v271, %v269
    %v390 = vpack.c.b16 %v272, %v270
    %v391 = vpack.c.b16 %v275, %v273
    %v392 = vpack.c.b16 %v276, %v274
    %v393 = vpack.c.b16 %v279, %v277
    %v394 = vpack.c.b16 %v280, %v278
    %v395 = vpack.c.b16 %v283, %v281
    %v396 = vpack.c.b16 %v284, %v282
    %v397 = vpack.c.b16 %v287, %v285
    %v398 = vpack.c.b16 %v288, %v286
    %v399 = vpack.c.b16 %v291, %v289
    %v400 = vpack.c.b16 %v292, %v290
    %v401 = vpack.c.b16 %v295, %v293
    %v402 = vpack.c.b16 %v296, %v294
    %v403 = vpack.c.b16 %v299, %v297
    %v404 = vpack.c.b16 %v300, %v298
    %v405 = vpack.c.b16 %v303, %v301
    %v406 = vpack.c.b16 %v304, %v302
    %v407 = vpack.c.b16 %v307, %v305
    %v408 = vpack.c.b16 %v308, %v306
    %v409 = vpack.c.b16 %v311, %v309
    %v410 = vpack.c.b16 %v312, %v310
    %v411 = vpack.c.b16 %v315, %v313
    %v412 = vpack.c.b16 %v316, %v314
    %v413 = vpack.c.b16 %v319, %v317
    %v414 = vpack.c.b16 %v320, %v318
    %v415 = vpack.c.b16 %v323, %v321
    %v416 = vpack.c.b16 %v324, %v322
    %v417 = vpack.c.b16 %v327, %v325
    %v418 = vpack.c.b16 %v328, %v326
    %v419 = vpack.c.b16 %v331, %v329
    %v420 = vpack.c.b16 %v332, %v330
    %v421 = vpack.c.b16 %v335, %v333
    %v422 = vpack.c.b16 %v336, %v334
    %v423 = vpack.c.b16 %v339, %v337
    %v424 = vpack.c.b16 %v340, %v338
    %v425 = vpack.c.b16 %v343, %v341
    %v426 = vpack.c.b16 %v344, %v342
    %v427 = vpack.c.b16 %v347, %v345
    %v428 = vpack.c.b16 %v348, %v346
    %v429 = vpack.c.b16 %v351, %v349
    %v430 = vpack.c.b16 %v352, %v350
    %v431 = vpack.c.b16 %v355, %v353
    %v432 = vpack.c.b16 %v356, %v354
    %v433 = vpack.c.b16 %v359, %v357
    %v434 = vpack.c.b16 %v360, %v358
    %v435 = vpack.c.b16 %v363, %v361
    %v436 = vpack.c.b16 %v364, %v362
    %v437 = vpack.c.b16 %v367, %v365
    %v438 = vpack.c.b16 %v368, %v366
    %v439 = vpack.c.b16 %v371, %v369
    %v440 = vpack.c.b16 %v372, %v370
    %v441 = vpack.c.b16 %v375, %v373
    %v442 = vpack.c.b16 %v376, %v374
    %v443 = vpack.c.b16 %v379, %v377
    %v444 = vpack.c.b16 %v380, %v378
    %509 = vmatprep.subr.bf16.mxu0 %v396
    %510 = vmatpush1.bf16.msra.mxu0 %v395
    %511 = vmatprep.subr.bf16.mxu0 %v394
    %512 = vmatpush1.bf16.msra.mxu0 %v393
    %513 = vmatprep.subr.bf16.mxu0 %v392
    %514 = vmatpush1.bf16.msra.mxu0 %v391
    %515 = vmatprep.subr.bf16.mxu0 %v390
    %516 = vmatpush1.bf16.msra.mxu0 %v389
    %517 = vmatprep.subr.bf16.mxu0 %v388
    %518 = vmatpush1.bf16.msra.mxu0 %v387
    %519 = vmatprep.subr.bf16.mxu0 %v386
    %520 = vmatpush1.bf16.msra.mxu0 %v385
    %521 = vmatprep.subr.bf16.mxu0 %v384
    %522 = vmatpush1.bf16.msra.mxu0 %v383
    %523 = vmatprep.subr.bf16.mxu0 %v382
    %524 = vmatpush1.bf16.msra.mxu0 %v381
    %525 = vmatprep.subr.bf16.mxu0 %v412
    %526 = vmatpush2.bf16.msra.mxu0 %v411
    %527 = vmatprep.subr.bf16.mxu0 %v410
    %528 = vmatpush2.bf16.msra.mxu0 %v409
    %529 = vmatprep.subr.bf16.mxu0 %v408
    %530 = vmatpush2.bf16.msra.mxu0 %v407
    %531 = vmatprep.subr.bf16.mxu0 %v406
    %532 = vmatpush2.bf16.msra.mxu0 %v405
    %533 = vmatprep.subr.bf16.mxu0 %v404
    %534 = vmatpush2.bf16.msra.mxu0 %v403
    %535 = vmatprep.subr.bf16.mxu0 %v402
    %536 = vmatpush2.bf16.msra.mxu0 %v401
    %537 = vmatprep.subr.bf16.mxu0 %v400
    %538 = vmatpush2.bf16.msra.mxu0 %v399
    %539 = vmatprep.subr.bf16.mxu0 %v398
    %540 = vmatpush2.bf16.msra.mxu0 %v397
    %541 = vmatprep.mubr.bf16.mxu0 %v99
    %542 = vmatmul.mubr.bf16.gmra.mxu0 %v98
    %v543 = vpop.f32.mrf.mxu0
    %v544 = vadd.f32 %v182, %v543
    %v545 = vpop.f32.mrf.mxu0
    %v546 = vadd.f32 %v186, %v545
    %v547 = vpop.f32.mrf.mxu0
    %v548 = vadd.f32 %v182, %v547
    %v549 = vpop.f32.mrf.mxu0
    %v550 = vadd.f32 %v186, %v549
    %551 = vmatprep.mubr.bf16.mxu0 %v103
    %552 = vmatmul.mubr.bf16.gmra.mxu0 %v102
    %v553 = vpop.f32.mrf.mxu0
    %v554 = vadd.f32 %v182, %v553
    %v555 = vpop.f32.mrf.mxu0
    %v556 = vadd.f32 %v186, %v555
    %v557 = vpop.f32.mrf.mxu0
    %v558 = vadd.f32 %v182, %v557
    %v559 = vpop.f32.mrf.mxu0
    %v560 = vadd.f32 %v186, %v559
    %561 = vmatprep.mubr.bf16.mxu0 %v107
    %562 = vmatmul.mubr.bf16.gmra.mxu0 %v106
    %v563 = vpop.f32.mrf.mxu0
    %v564 = vadd.f32 %v182, %v563
    %v565 = vpop.f32.mrf.mxu0
    %v566 = vadd.f32 %v186, %v565
    %v567 = vpop.f32.mrf.mxu0
    %v568 = vadd.f32 %v182, %v567
    %v569 = vpop.f32.mrf.mxu0
    %v570 = vadd.f32 %v186, %v569
    %571 = vmatprep.mubr.bf16.mxu0 %v111
    %572 = vmatmul.mubr.bf16.gmra.mxu0 %v110
    %v573 = vpop.f32.mrf.mxu0
    %v574 = vadd.f32 %v182, %v573
    %v575 = vpop.f32.mrf.mxu0
    %v576 = vadd.f32 %v186, %v575
    %v577 = vpop.f32.mrf.mxu0
    %v578 = vadd.f32 %v182, %v577
    %v579 = vpop.f32.mrf.mxu0
    %v580 = vadd.f32 %v186, %v579
    %581 = vdwg.mxu0
    %582 = vmatprep.subr.bf16.mxu0 %v428
    %583 = vmatpush1.bf16.msra.mxu0 %v427
    %584 = vmatprep.subr.bf16.mxu0 %v426
    %585 = vmatpush1.bf16.msra.mxu0 %v425
    %586 = vmatprep.subr.bf16.mxu0 %v424
    %587 = vmatpush1.bf16.msra.mxu0 %v423
    %588 = vmatprep.subr.bf16.mxu0 %v422
    %589 = vmatpush1.bf16.msra.mxu0 %v421
    %590 = vmatprep.subr.bf16.mxu0 %v420
    %591 = vmatpush1.bf16.msra.mxu0 %v419
    %592 = vmatprep.subr.bf16.mxu0 %v418
    %593 = vmatpush1.bf16.msra.mxu0 %v417
    %594 = vmatprep.subr.bf16.mxu0 %v416
    %595 = vmatpush1.bf16.msra.mxu0 %v415
    %596 = vmatprep.subr.bf16.mxu0 %v414
    %597 = vmatpush1.bf16.msra.mxu0 %v413
    %598 = vmatprep.subr.bf16.mxu0 %v444
    %599 = vmatpush2.bf16.msra.mxu0 %v443
    %600 = vmatprep.subr.bf16.mxu0 %v442
    %601 = vmatpush2.bf16.msra.mxu0 %v441
    %602 = vmatprep.subr.bf16.mxu0 %v440
    %603 = vmatpush2.bf16.msra.mxu0 %v439
    %604 = vmatprep.subr.bf16.mxu0 %v438
    %605 = vmatpush2.bf16.msra.mxu0 %v437
    %606 = vmatprep.subr.bf16.mxu0 %v436
    %607 = vmatpush2.bf16.msra.mxu0 %v435
    %608 = vmatprep.subr.bf16.mxu0 %v434
    %609 = vmatpush2.bf16.msra.mxu0 %v433
    %610 = vmatprep.subr.bf16.mxu0 %v432
    %611 = vmatpush2.bf16.msra.mxu0 %v431
    %612 = vmatprep.subr.bf16.mxu0 %v430
    %613 = vmatpush2.bf16.msra.mxu0 %v429
    %614 = vmatprep.mubr.bf16.mxu0 %v101
    %615 = vmatmul.mubr.bf16.gmra.mxu0 %v100
    %v616 = vpop.f32.mrf.mxu0
    %v617 = vadd.f32 %v544, %v616
    %v618 = vpop.f32.mrf.mxu0
    %v619 = vadd.f32 %v546, %v618
    %v620 = vpop.f32.mrf.mxu0
    %v621 = vadd.f32 %v548, %v620
    %v622 = vpop.f32.mrf.mxu0
    %v623 = vadd.f32 %v550, %v622
    %624 = vmatprep.mubr.bf16.mxu0 %v105
    %625 = vmatmul.mubr.bf16.gmra.mxu0 %v104
    %v626 = vpop.f32.mrf.mxu0
    %v627 = vadd.f32 %v554, %v626
    %v628 = vpop.f32.mrf.mxu0
    %v629 = vadd.f32 %v556, %v628
    %v630 = vpop.f32.mrf.mxu0
    %v631 = vadd.f32 %v558, %v630
    %v632 = vpop.f32.mrf.mxu0
    %v633 = vadd.f32 %v560, %v632
    %634 = vmatprep.mubr.bf16.mxu0 %v109
    %635 = vmatmul.mubr.bf16.gmra.mxu0 %v108
    %v636 = vpop.f32.mrf.mxu0
    %v637 = vadd.f32 %v564, %v636
    %v638 = vpop.f32.mrf.mxu0
    %v639 = vadd.f32 %v566, %v638
    %v640 = vpop.f32.mrf.mxu0
    %v641 = vadd.f32 %v568, %v640
    %v642 = vpop.f32.mrf.mxu0
    %v643 = vadd.f32 %v570, %v642
    %644 = vmatprep.mubr.bf16.mxu0 %v113
    %645 = vmatmul.mubr.bf16.gmra.mxu0 %v112
    %v646 = vpop.f32.mrf.mxu0
    %v647 = vadd.f32 %v574, %v646
    %v648 = vpop.f32.mrf.mxu0
    %v649 = vadd.f32 %v576, %v648
    %v650 = vpop.f32.mrf.mxu0
    %v651 = vadd.f32 %v578, %v650
    %v652 = vpop.f32.mrf.mxu0
    %v653 = vadd.f32 %v580, %v652
    %654 = vdwg.mxu0
    %v655 = vmax.f32 %v617, 0.0
    %v656 = vmax.f32 %v619, 0.0
    %v657 = vmax.f32 %v621, 0.0
    %v658 = vmax.f32 %v623, 0.0
    %v659 = vmax.f32 %v627, 0.0
    %v660 = vmax.f32 %v629, 0.0
    %v661 = vmax.f32 %v631, 0.0
    %v662 = vmax.f32 %v633, 0.0
    %v663 = vmax.f32 %v637, 0.0
    %v664 = vmax.f32 %v639, 0.0
    %v665 = vmax.f32 %v641, 0.0
    %v666 = vmax.f32 %v643, 0.0
    %v667 = vmax.f32 %v647, 0.0
    %v668 = vmax.f32 %v649, 0.0
    %v669 = vmax.f32 %v651, 0.0
    %v670 = vmax.f32 %v653, 0.0
    %v671 = vpack.c.bf16 %v657, %v655
    %v672 = vpack.c.bf16 %v658, %v656
    %v673 = vpack.c.bf16 %v661, %v659
    %v674 = vpack.c.bf16 %v662, %v660
    %v675 = vpack.c.bf16 %v665, %v663
    %v676 = vpack.c.bf16 %v666, %v664
    %v677 = vpack.c.bf16 %v669, %v667
    %v678 = vpack.c.bf16 %v670, %v668
    %v679 = vld [vmem:[#allocation7] sm:$0xf]
    %v680 = vld [vmem:[#allocation7 + $0x4] sm:$0xf]
    %v681 = vld [vmem:[#allocation7 + $0x8] sm:$0xf]
    %v682 = vld [vmem:[#allocation7 + $0xc] sm:$0xf]
    %v683 = vld [vmem:[#allocation7 + $0x10] sm:$0xf]
    %v684 = vld [vmem:[#allocation7 + $0x14] sm:$0xf]
    %v685 = vld [vmem:[#allocation7 + $0x18] sm:$0xf]
    %v686 = vld [vmem:[#allocation7 + $0x1c] sm:$0xf]
    %v687 = vld [vmem:[#allocation7 + $0x20] sm:$0xf]
    %v688 = vld [vmem:[#allocation7 + $0x24] sm:$0xf]
    %v689 = vld [vmem:[#allocation7 + $0x28] sm:$0xf]
    %v690 = vld [vmem:[#allocation7 + $0x2c] sm:$0xf]
    %v691 = vld [vmem:[#allocation7 + $0x30] sm:$0xf]
    %v692 = vld [vmem:[#allocation7 + $0x34] sm:$0xf]
    %v693 = vld [vmem:[#allocation7 + $0x38] sm:$0xf]
    %v694 = vld [vmem:[#allocation7 + $0x3c] sm:$0xf]
    %v695 = vld [vmem:[#allocation7 + $0x40] sm:$0xf]
    %v696 = vld [vmem:[#allocation7 + $0x44] sm:$0xf]
    %v697 = vld [vmem:[#allocation7 + $0x48] sm:$0xf]
    %v698 = vld [vmem:[#allocation7 + $0x4c] sm:$0xf]
    %v699 = vld [vmem:[#allocation7 + $0x50] sm:$0xf]
    %v700 = vld [vmem:[#allocation7 + $0x54] sm:$0xf]
    %v701 = vld [vmem:[#allocation7 + $0x58] sm:$0xf]
    %v702 = vld [vmem:[#allocation7 + $0x5c] sm:$0xf]
    %v703 = vld [vmem:[#allocation7 + $0x60] sm:$0xf]
    %v704 = vld [vmem:[#allocation7 + $0x64] sm:$0xf]
    %v705 = vld [vmem:[#allocation7 + $0x68] sm:$0xf]
    %v706 = vld [vmem:[#allocation7 + $0x6c] sm:$0xf]
    %v707 = vld [vmem:[#allocation7 + $0x70] sm:$0xf]
    %v708 = vld [vmem:[#allocation7 + $0x74] sm:$0xf]
    %v709 = vld [vmem:[#allocation7 + $0x78] sm:$0xf]
    %v710 = vld [vmem:[#allocation7 + $0x7c] sm:$0xf]
    %v712 = vlaneseq
    %v713 = vshrl.u32 %v712, 7
    %v714 = vsub.s32 0, %v713
    %v715 = vrot.slane %v64, %v714
    %v749 = vunpack.c.l.b16 %v679
    %v750 = vunpack.c.l.b16 %v680
    %v751 = vunpack.c.l.b16 %v681
    %v752 = vunpack.c.l.b16 %v682
    %v753 = vunpack.c.l.b16 %v683
    %v754 = vunpack.c.l.b16 %v684
    %v755 = vunpack.c.l.b16 %v685
    %v756 = vunpack.c.l.b16 %v686
    %v757 = vunpack.c.l.b16 %v687
    %v758 = vunpack.c.l.b16 %v688
    %v759 = vunpack.c.l.b16 %v689
    %v760 = vunpack.c.l.b16 %v690
    %v761 = vunpack.c.l.b16 %v691
    %v762 = vunpack.c.l.b16 %v692
    %v763 = vunpack.c.l.b16 %v693
    %v764 = vunpack.c.l.b16 %v694
    %v765 = vunpack.c.l.b16 %v695
    %v766 = vunpack.c.l.b16 %v696
    %v767 = vunpack.c.l.b16 %v697
    %v768 = vunpack.c.l.b16 %v698
    %v769 = vunpack.c.l.b16 %v699
    %v770 = vunpack.c.l.b16 %v700
    %v771 = vunpack.c.l.b16 %v701
    %v772 = vunpack.c.l.b16 %v702
    %v773 = vunpack.c.l.b16 %v703
    %v774 = vunpack.c.l.b16 %v704
    %v775 = vunpack.c.l.b16 %v705
    %v776 = vunpack.c.l.b16 %v706
    %v777 = vunpack.c.l.b16 %v707
    %v778 = vunpack.c.l.b16 %v708
    %v779 = vunpack.c.l.b16 %v709
    %v780 = vunpack.c.l.b16 %v710
    %v781 = vpack.c.b16 %v750, %v749
    %v782 = vpack.c.b16 %v752, %v751
    %v783 = vpack.c.b16 %v754, %v753
    %v784 = vpack.c.b16 %v756, %v755
    %v785 = vpack.c.b16 %v758, %v757
    %v786 = vpack.c.b16 %v760, %v759
    %v787 = vpack.c.b16 %v762, %v761
    %v788 = vpack.c.b16 %v764, %v763
    %v789 = vpack.c.b16 %v766, %v765
    %v790 = vpack.c.b16 %v768, %v767
    %v791 = vpack.c.b16 %v770, %v769
    %v792 = vpack.c.b16 %v772, %v771
    %v793 = vpack.c.b16 %v774, %v773
    %v794 = vpack.c.b16 %v776, %v775
    %v795 = vpack.c.b16 %v778, %v777
    %v796 = vpack.c.b16 %v780, %v779
    %813 = vmatprep.subr.bf16.mxu0 0
    %814 = vmatpush1.bf16.msra.mxu0 %v788
    %815 = vmatprep.subr.bf16.mxu0 0
    %816 = vmatpush1.bf16.msra.mxu0 %v787
    %817 = vmatprep.subr.bf16.mxu0 0
    %818 = vmatpush1.bf16.msra.mxu0 %v786
    %819 = vmatprep.subr.bf16.mxu0 0
    %820 = vmatpush1.bf16.msra.mxu0 %v785
    %821 = vmatprep.subr.bf16.mxu0 0
    %822 = vmatpush1.bf16.msra.mxu0 %v784
    %823 = vmatprep.subr.bf16.mxu0 0
    %824 = vmatpush1.bf16.msra.mxu0 %v783
    %825 = vmatprep.subr.bf16.mxu0 0
    %826 = vmatpush1.bf16.msra.mxu0 %v782
    %827 = vmatprep.subr.bf16.mxu0 0
    %828 = vmatpush1.bf16.msra.mxu0 %v781
    %829 = vmatprep.subr.bf16.mxu0 0
    %830 = vmatpush2.bf16.msra.mxu0 %v796
    %831 = vmatprep.subr.bf16.mxu0 0
    %832 = vmatpush2.bf16.msra.mxu0 %v795
    %833 = vmatprep.subr.bf16.mxu0 0
    %834 = vmatpush2.bf16.msra.mxu0 %v794
    %835 = vmatprep.subr.bf16.mxu0 0
    %836 = vmatpush2.bf16.msra.mxu0 %v793
    %837 = vmatprep.subr.bf16.mxu0 0
    %838 = vmatpush2.bf16.msra.mxu0 %v792
    %839 = vmatprep.subr.bf16.mxu0 0
    %840 = vmatpush2.bf16.msra.mxu0 %v791
    %841 = vmatprep.subr.bf16.mxu0 0
    %842 = vmatpush2.bf16.msra.mxu0 %v790
    %843 = vmatprep.subr.bf16.mxu0 0
    %844 = vmatpush2.bf16.msra.mxu0 %v789
    %845 = vmatprep.mubr.bf16.mxu0 %v672
    %846 = vmatmul.mubr.bf16.gmra.mxu0 %v671
    %v847 = vpop.f32.mrf.mxu0
    %v848 = vadd.f32 %v715, %v847
    %v849 = vpop.f32.mrf.mxu0
    %v850 = vpop.f32.mrf.mxu0
    %v851 = vadd.f32 %v715, %v850
    %v852 = vpop.f32.mrf.mxu0
    %853 = vmatprep.mubr.bf16.mxu0 %v674
    %854 = vmatmul.mubr.bf16.gmra.mxu0 %v673
    %v855 = vpop.f32.mrf.mxu0
    %v856 = vadd.f32 %v715, %v855
    %v857 = vpop.f32.mrf.mxu0
    %v858 = vpop.f32.mrf.mxu0
    %v859 = vadd.f32 %v715, %v858
    %v860 = vpop.f32.mrf.mxu0
    %861 = vmatprep.mubr.bf16.mxu0 %v676
    %862 = vmatmul.mubr.bf16.gmra.mxu0 %v675
    %v863 = vpop.f32.mrf.mxu0
    %v864 = vadd.f32 %v715, %v863
    %v865 = vpop.f32.mrf.mxu0
    %v866 = vpop.f32.mrf.mxu0
    %v867 = vadd.f32 %v715, %v866
    %v868 = vpop.f32.mrf.mxu0
    %869 = vmatprep.mubr.bf16.mxu0 %v678
    %870 = vmatmul.mubr.bf16.gmra.mxu0 %v677
    %v871 = vpop.f32.mrf.mxu0
    %v872 = vadd.f32 %v715, %v871
    %v873 = vpop.f32.mrf.mxu0
    %v874 = vpop.f32.mrf.mxu0
    %v875 = vadd.f32 %v715, %v874
    %v876 = vpop.f32.mrf.mxu0
    %877 = vdwg.mxu0
    %v878 = vmax.f32 %v848, 0.0
    %v879 = vmax.f32 %v851, 0.0
    %v880 = vmax.f32 %v856, 0.0
    %v881 = vmax.f32 %v859, 0.0
    %v882 = vmax.f32 %v864, 0.0
    %v883 = vmax.f32 %v867, 0.0
    %v884 = vmax.f32 %v872, 0.0
    %v885 = vmax.f32 %v875, 0.0
    %v887 = vlaneseq
    %v888 = vshrl.u32 %v887, 7
    %v889 = vsub.s32 0, %v888
    %v890 = vrot.slane %v65, %v889
    %v892 = vmul.f32 %v878, %v890
    %v893 = vmul.f32 %v879, %v890
    %v894 = vmul.f32 %v880, %v890
    %v895 = vmul.f32 %v881, %v890
    %v896 = vmul.f32 %v882, %v890
    %v897 = vmul.f32 %v883, %v890
    %v898 = vmul.f32 %v884, %v890
    %v899 = vmul.f32 %v885, %v890
    %900 = vadd.xlane.f32.xlu0 %v892
    %v901 = vpop.xlane.xlu0 %900
    %902 = vadd.xlane.f32.xlu0 %v893
    %v903 = vpop.xlane.xlu0 %902
    %904 = vadd.xlane.f32.xlu0 %v894
    %v905 = vpop.xlane.xlu0 %904
    %906 = vadd.xlane.f32.xlu0 %v895
    %v907 = vpop.xlane.xlu0 %906
    %908 = vadd.xlane.f32.xlu0 %v896
    %v909 = vpop.xlane.xlu0 %908
    %910 = vadd.xlane.f32.xlu0 %v897
    %v911 = vpop.xlane.xlu0 %910
    %912 = vadd.xlane.f32.xlu0 %v898
    %v913 = vpop.xlane.xlu0 %912
    %914 = vadd.xlane.f32.xlu0 %v899
    %v915 = vpop.xlane.xlu0 %914
    %s916 = sld [smem:[#allocation2]]
    %v917 = vstv %s916
    %v918 = vadd.f32 %v901, %v917
    %v919 = vadd.f32 %v903, %v917
    %v920 = vadd.f32 %v905, %v917
    %v921 = vadd.f32 %v907, %v917
    %v922 = vadd.f32 %v909, %v917
    %v923 = vadd.f32 %v911, %v917
    %v924 = vadd.f32 %v913, %v917
    %v925 = vadd.f32 %v915, %v917
    %vm926 = vcmask 7168
    %927 = vst.msk [vmem:[%s5] sm:$0xff] %vm926, %v918
    %928 = vst.msk [vmem:[%s5 + $0x8] sm:$0xff] %vm926, %v919
    %929 = vst.msk [vmem:[%s5 + $0x10] sm:$0xff] %vm926, %v920
    %930 = vst.msk [vmem:[%s5 + $0x18] sm:$0xff] %vm926, %v921
    %931 = vst.msk [vmem:[%s5 + $0x20] sm:$0xff] %vm926, %v922
    %932 = vst.msk [vmem:[%s5 + $0x28] sm:$0xff] %vm926, %v923
    %933 = vst.msk [vmem:[%s5 + $0x30] sm:$0xff] %vm926, %v924
    %934 = vst.msk [vmem:[%s5 + $0x38] sm:$0xff] %vm926, %v925
    // Predicated region
    $region34: #{tpu_custom_call.1} parent=1 // pred_check
      _
    $region35: #{tpu_custom_call.1} parent=1 // pred_check_branch
      %936 = sbr.rel (0) target = $region37
    $region36: #{tpu_custom_call.1} parent=1 // pred_region
      _
    $region37: #{tpu_custom_call.1} parent=1 // pred_fallthru
      _
    // Predicated region
    $region38: #{tpu_custom_call.1} parent=1 // pred_check
      _
    $region39: #{tpu_custom_call.1} parent=1 // pred_check_branch
      %938 = sbr.rel (0) target = $region41
    $region40: #{tpu_custom_call.1} parent=1 // pred_region
      _
    $region41: #{tpu_custom_call.1} parent=1 // pred_fallthru
      _
    %939 = vsyncpa [#allocation4], 1
    %940 = vsyncpa [#allocation6], 1

</llo_original>
